<compile_context>
chip_gen: v7x
topology: tpu7x:2x2x1
jax: 0.10.0
libtpu: 0.0.40
codegen_flags: <defaults>
</compile_context>

<pallas_src>
import jax
import jax.numpy as jnp
from jax.experimental import pallas as pl
from jax.experimental.pallas import tpu as pltpu


def fused_linear_kernel(x_ref, w_ref, b_ref, o_ref):
    # One batch tile per grid step.  W/b use a constant index_map so they stay
    # VMEM-resident across grid steps; accumulation is always f32 on the MXU.
    acc = jnp.dot(x_ref[...], w_ref[...], preferred_element_type=jnp.float32)
    o_ref[...] = (acc + b_ref[...]).astype(o_ref.dtype)


def _round_up(x, m):
    return ((x + m - 1) // m) * m


def _pick_batch_tile(B, tb):
    """Batch tile: multiple of 8, as large as requested, but keep >= 2 grid
    steps when the batch allows so the 'parallel' axis can be sharded across
    both TensorCores on v7x (single step is fine/cheaper on v5e/v6e tiny B)."""
    b8 = _round_up(max(B, 8), 8)
    tbu = _round_up(min(tb, b8), 8)
    if tbu >= b8 and b8 >= 16:
        tbu = _round_up((b8 + 1) // 2, 8)   # split whole batch into 2 steps
    b_pad = _round_up(b8, tbu)
    return tbu, b_pad


def fold_params(params):
    """Collapse the 3 linear layers (no activations) into one affine map in
    fp32:  y = x @ W + b,  W = W1 W2 W3,  b = (b1 W2 + b2) W3 + b3.
    Exact algebraic identity; do once at init time in production."""
    w1, b1 = params["w1"], params["b1"]
    w2, b2 = params["w2"], params["b2"]
    w3, b3 = params["w3"], params["b3"]
    w = (w1 @ w2) @ w3
    b = (b1 @ w2 + b2) @ w3 + b3
    return w, b


def simple_net_forward(x, params, *, tb=1024, compute_dtype=jnp.float32):
    """x: (B, D_in). params: w1,b1,w2,b2,w3,b3 with weights stored (in, out)
    and biases (1, out) — i.e. torch's y = x @ W.T + b with W pre-transposed."""
    w, b = fold_params(params)            # fp32 fold (amortize at init)
    B, D_in = x.shape
    D_out = w.shape[1]

    xk = x.astype(compute_dtype)          # bf16 option halves x HBM stream
    wk = w.astype(compute_dtype)
    bk = b                                # bias stays f32 (added to f32 acc)
    out_dtype = compute_dtype

    TB, B_pad = _pick_batch_tile(B, tb)
    if B_pad != B:
        xk = jnp.pad(xk, ((0, B_pad - B), (0, 0)))
    grid = (B_pad // TB,)

    nbytes = lambda a: a.size * a.dtype.itemsize
    in_itemsize = jnp.dtype(compute_dtype).itemsize
    out_itemsize = jnp.dtype(out_dtype).itemsize
    bytes_accessed = (nbytes(xk) + nbytes(wk) + nbytes(bk)
                      + B_pad * D_out * out_itemsize)

    # Double-buffered x / out blocks + resident (still buffered) W and b,
    # with generous headroom; also covers v5e's 16 MiB default scoped limit.
    need = (2 * TB * D_in * in_itemsize
            + 2 * TB * D_out * out_itemsize
            + 2 * (nbytes(wk) + nbytes(bk)))
    vmem_limit = int(min(max(4 * need, 32 << 20), 64 << 20))

    out = pl.pallas_call(
        fused_linear_kernel,
        out_shape=jax.ShapeDtypeStruct((B_pad, D_out), out_dtype),
        grid=grid,
        in_specs=[
            pl.BlockSpec((TB, D_in), lambda i: (i, 0)),   # x: batch-tiled
            pl.BlockSpec(wk.shape, lambda i: (0, 0)),     # W: VMEM-resident
            pl.BlockSpec(bk.shape, lambda i: (0, 0)),     # b: VMEM-resident
        ],
        out_specs=pl.BlockSpec((TB, D_out), lambda i: (i, 0)),
        compiler_params=pltpu.CompilerParams(
            dimension_semantics=("parallel",),            # megacore-shardable
            vmem_limit_bytes=vmem_limit,
        ),
        cost_estimate=pl.CostEstimate(
            flops=2 * B_pad * D_in * D_out,
            transcendentals=0,
            bytes_accessed=bytes_accessed,
        ),
    )(xk, wk, bk)

    return out[:B] if B_pad != B else out


def init_params(key, D_in, H1, H2, D_out):
    """Deterministic init mimicking PyTorch nn.Linear default (uniform in
    [-1/sqrt(fan_in), 1/sqrt(fan_in)]). Weights stored as (in, out)."""
    ks = jax.random.split(key, 6)

    def linear(kw, kb, fan_in, fan_out):
        bound = 1.0 / jnp.sqrt(fan_in)
        w = jax.random.uniform(kw, (fan_in, fan_out), jnp.float32, -bound, bound)
        b = jax.random.uniform(kb, (1, fan_out), jnp.float32, -bound, bound)
        return w, b

    w1, b1 = linear(ks[0], ks[1], D_in, H1)
    w2, b2 = linear(ks[2], ks[3], H1, H2)
    w3, b3 = linear(ks[4], ks[5], H2, D_out)
    return {"w1": w1, "b1": b1, "w2": w2, "b2": b2, "w3": w3, "b3": b3}


if __name__ == "__main__":
    # SimpleNet(D_in=32, H1=64, H2=64, D_out=16); batch chosen so the batch
    # grid has 2 steps (512 -> TB=256 -> grid of 2, megacore-friendly).
    B, D_in, H1, H2, D_out = 512, 32, 64, 64, 16

    key = jax.random.PRNGKey(0)
    k_x, k_p = jax.random.split(key)

    x = jax.random.normal(k_x, (B, D_in), dtype=jnp.float32)
    params = init_params(k_p, D_in, H1, H2, D_out)

    # fp32 path (matches nn.Linear fp32 semantics up to rounding of the fold).
    out = simple_net_forward(x, params)
    jax.block_until_ready(out)

    # Reference in plain JAX (same math as torch: y = x @ W.T + b, 3 layers).
    ref = x
    for wname, bname in (("w1", "b1"), ("w2", "b2"), ("w3", "b3")):
        ref = ref @ params[wname] + params[bname]
    assert out.shape == (B, D_out)
    assert out.dtype == jnp.float32
    assert jnp.allclose(out, ref, atol=1e-4, rtol=1e-4)

    # bf16-stream variant (halved HBM traffic); looser tolerance for bf16.
    out_bf16 = simple_net_forward(x, params, compute_dtype=jnp.bfloat16)
    jax.block_until_ready(out_bf16)
    assert out_bf16.shape == (B, D_out)
    assert jnp.allclose(out_bf16.astype(jnp.float32), ref, atol=3e-2, rtol=3e-2)

    print("KERNEL_OK")
</pallas_src>

<mosaic_0001>
module attributes {stable_mosaic.version = 11 : i64} {
  func.func @fused_linear_kernel(%arg0: i32, %arg1: memref<256x32xf32, #tpu.memory_space<vmem>>, %arg2: memref<32x16xf32, #tpu.memory_space<vmem>>, %arg3: memref<1x16xf32, #tpu.memory_space<vmem>>, %arg4: memref<256x16xf32, #tpu.memory_space<vmem>>) attributes {dimension_semantics = [#tpu.dimension_semantics<parallel>], iteration_bounds = array<i64: 2>, scalar_prefetch = 0 : i64, scratch_operands = 0 : i64, tpu.core_type = #tpu.core_type<tc>, window_params = [{transform_indices = @transform_0, window_bounds = array<i64: 256, 32>}, {pipeline_mode = #tpu.pipeline_mode<synchronous>, transform_indices = @transform_1, window_bounds = array<i64: 32, 16>}, {pipeline_mode = #tpu.pipeline_mode<synchronous>, transform_indices = @transform_2, window_bounds = array<i64: 1, 16>}, {transform_indices = @transform_3, window_bounds = array<i64: 256, 16>}]} {
    %c0 = arith.constant 0 : index
    %c0_0 = arith.constant 0 : index
    %0 = vector.load %arg1[%c0, %c0_0] : memref<256x32xf32, #tpu.memory_space<vmem>>, vector<256x32xf32>
    %c0_1 = arith.constant 0 : index
    %c0_2 = arith.constant 0 : index
    %1 = vector.load %arg2[%c0_1, %c0_2] : memref<32x16xf32, #tpu.memory_space<vmem>>, vector<32x16xf32>
    %cst = arith.constant dense<0.000000e+00> : vector<256x16xf32>
    %2 = tpu.matmul %0, %1, %cst {dimension_numbers = #tpu.dot_dimension_numbers<[1], [0], [0], [1], [0, 0, 1, 1], [], []>} : vector<256x32xf32>, vector<32x16xf32>, vector<256x16xf32> -> vector<256x16xf32>
    %c0_3 = arith.constant 0 : index
    %c0_4 = arith.constant 0 : index
    %3 = vector.load %arg3[%c0_3, %c0_4] : memref<1x16xf32, #tpu.memory_space<vmem>>, vector<1x16xf32>
    %4 = vector.broadcast %3 : vector<1x16xf32> to vector<256x16xf32>
    %5 = arith.addf %2, %4 : vector<256x16xf32>
    %c0_5 = arith.constant 0 : index
    %c0_6 = arith.constant 0 : index
    %6 = vector.load %arg4[%c0_5, %c0_6] : memref<256x16xf32, #tpu.memory_space<vmem>>, vector<256x16xf32>
    tpu.vector_store %arg4[%c0_5, %c0_6], %5 {strides = array<i32>} : memref<256x16xf32, #tpu.memory_space<vmem>>, vector<256x16xf32>,
    return
  }
  func.func @transform_0(%arg0: i32) -> (i32, i32) {
    %c0_i32 = arith.constant 0 : i32
    %c0_i32_0 = arith.constant 0 : i32
    return %arg0, %c0_i32 : i32, i32
  }
  func.func @transform_1(%arg0: i32) -> (i32, i32) {
    %c0_i32 = arith.constant 0 : i32
    %c0_i32_0 = arith.constant 0 : i32
    %c0_i32_1 = arith.constant 0 : i32
    return %c0_i32, %c0_i32_0 : i32, i32
  }
  func.func @transform_2(%arg0: i32) -> (i32, i32) {
    %c0_i32 = arith.constant 0 : i32
    %c0_i32_0 = arith.constant 0 : i32
    %c0_i32_1 = arith.constant 0 : i32
    return %c0_i32, %c0_i32_0 : i32, i32
  }
  func.func @transform_3(%arg0: i32) -> (i32, i32) {
    %c0_i32 = arith.constant 0 : i32
    %c0_i32_0 = arith.constant 0 : i32
    return %arg0, %c0_i32 : i32, i32
  }
}

</mosaic_0001>

<llo_original>
// kernel: tpu_custom_call.1
$region0: #{tpu_custom_call.1}
  #allocation0 [shape = 'u32[]', space=smem, size = 0x4, offset = 0x4, fixed_abs, tag = 'smem constant byte address 0x4 - core index']
  #allocation1 [shape = 'u32[144,128]{1,0:T(1,128)}', space=vmem, size = 0x12000, scoped, tag = 'internal scratch']
  %s0 = inlined_call_operand.vmem [shape: f32[512,32], index: 0, kind: input, shape index: {}]
  %s1 = inlined_call_operand.vmem [shape: f32[32,16], index: 1, kind: input, shape index: {}]
  %s2 = inlined_call_operand.vmem [shape: f32[1,16], index: 2, kind: input, shape index: {}]
  %s3 = inlined_call_operand.vmem [shape: f32[512,16], index: 3, kind: output, shape index: {}]
  %s4 = sld [smem:[#allocation0]]
  $region45: #{tpu_custom_call.1} parent=0
    _
  %s6 = ssub.s32 1, %s4
  %s7 = scalar_select 0, %s6, %s4
  loop: start=0, step=1, limit=4
  $region2: #{tpu_custom_call.1} parent=0 // loop_pre_header
    _
  $region3: #{tpu_custom_call.1} parent=0 // loop_header
    %s9 = sphi 0, %s13
    %p10 = scmp.ge.s32.totalorder %s9, 4
    %s19 = sphi 0, %s21
    %s22 = sphi 0, %s19
    %s23 = sphi 0, %s22
    %s39 = sphi 0, %s23
    %s43 = sphi 0, %s43
    %s45 = sphi 0, %s43
    %s46 = sphi 0, %s45
    %s60 = sphi 0, %s46
    %s64 = sphi 0, %s64
    %s66 = sphi 0, %s64
    %s67 = sphi 0, %s66
    %s81 = sphi 0, %s67
    %s87 = sphi 0, %s89
    %s90 = sphi 0, %s87
    %s91 = sphi 0, %s90
    %s107 = sphi 0, %s91
  $region4: #{tpu_custom_call.1} parent=0 // loop_header_branch
    %12 = sbr.rel (%p10) target = $region8
  $region5: #{tpu_custom_call.1} parent=0 // loop_body
    %s14 = ssub.s32 %s9, 1
    %s15 = ssub.s32 %s9, 2
    %s16 = sadd.s32 %s9, 1
    %s17 = ssub.s32 %s9, %s16
    %p18 = scmp.eq.s32.totalorder %s17, 0
    %s20 = sadd.s32 %s19, 1
    %s21 = scalar_select %p18, %s19, %s20
    %p24 = pneg %p18
    %p25 = scmp.eq.s32.totalorder %s9, 1
    %p26 = por %p24, %p25
    %p27 = scmp.ne.s32.totalorder %s19, %s22
    %p28 = scmp.eq.s32.totalorder %s9, 0
    %p29 = por %p27, %p28
    %p30 = scmp.ne.s32.totalorder %s19, %s22
    %p31 = scmp.eq.s32.totalorder %s14, 1
    %p32 = por %p30, %p31
    %p33 = scmp.ne.s32.totalorder %s22, %s23
    %p34 = scmp.eq.s32.totalorder %s14, 0
    %p35 = por %p33, %p34
    %p36 = scmp.ne.s32.totalorder %s22, %s23
    %p37 = scmp.eq.s32.totalorder %s15, 1
    %p38 = por %p36, %p37
    %p40 = scmp.ne.s32.totalorder %s23, %s39
    %p41 = scmp.eq.s32.totalorder %s15, 0
    %p42 = por %p40, %p41
    %s44 = sadd.s32 %s43, 1
    %p47 = scmp.eq.s32.totalorder %s9, 1
    %p48 = scmp.ne.s32.totalorder %s43, %s45
    %p49 = scmp.eq.s32.totalorder %s9, 0
    %p50 = por %p48, %p49
    %p51 = scmp.ne.s32.totalorder %s43, %s45
    %p52 = scmp.eq.s32.totalorder %s14, 1
    %p53 = por %p51, %p52
    %p54 = scmp.ne.s32.totalorder %s45, %s46
    %p55 = scmp.eq.s32.totalorder %s14, 0
    %p56 = por %p54, %p55
    %p57 = scmp.ne.s32.totalorder %s45, %s46
    %p58 = scmp.eq.s32.totalorder %s15, 1
    %p59 = por %p57, %p58
    %p61 = scmp.ne.s32.totalorder %s46, %s60
    %p62 = scmp.eq.s32.totalorder %s15, 0
    %p63 = por %p61, %p62
    %s65 = sadd.s32 %s64, 1
    %p68 = scmp.eq.s32.totalorder %s9, 1
    %p69 = scmp.ne.s32.totalorder %s64, %s66
    %p70 = scmp.eq.s32.totalorder %s9, 0
    %p71 = por %p69, %p70
    %p72 = scmp.ne.s32.totalorder %s64, %s66
    %p73 = scmp.eq.s32.totalorder %s14, 1
    %p74 = por %p72, %p73
    %p75 = scmp.ne.s32.totalorder %s66, %s67
    %p76 = scmp.eq.s32.totalorder %s14, 0
    %p77 = por %p75, %p76
    %p78 = scmp.ne.s32.totalorder %s66, %s67
    %p79 = scmp.eq.s32.totalorder %s15, 1
    %p80 = por %p78, %p79
    %p82 = scmp.ne.s32.totalorder %s67, %s81
    %p83 = scmp.eq.s32.totalorder %s15, 0
    %p84 = por %p82, %p83
    %s85 = ssub.s32 %s9, %s16
    %p86 = scmp.eq.s32.totalorder %s85, 0
    %s88 = sadd.s32 %s87, 1
    %s89 = scalar_select %p86, %s87, %s88
    %p92 = pneg %p86
    %p93 = scmp.eq.s32.totalorder %s9, 1
    %p94 = por %p92, %p93
    %p95 = scmp.ne.s32.totalorder %s87, %s90
    %p96 = scmp.eq.s32.totalorder %s9, 0
    %p97 = por %p95, %p96
    %p98 = scmp.ne.s32.totalorder %s87, %s90
    %p99 = scmp.eq.s32.totalorder %s14, 1
    %p100 = por %p98, %p99
    %p101 = scmp.ne.s32.totalorder %s90, %s91
    %p102 = scmp.eq.s32.totalorder %s14, 0
    %p103 = por %p101, %p102
    %p104 = scmp.ne.s32.totalorder %s90, %s91
    %p105 = scmp.eq.s32.totalorder %s15, 1
    %p106 = por %p104, %p105
    %p108 = scmp.ne.s32.totalorder %s91, %s107
    %p109 = scmp.eq.s32.totalorder %s15, 0
    %p110 = por %p108, %p109
    %p111 = scmp.le.s32.totalorder 1, %s9
    %p112 = scmp.lt.s32.totalorder %s9, 3
    %p113 = pnand %p111, %p112
    %p114 = pneg %p113
    // Predicated region
    $region9: #{tpu_custom_call.1} parent=5 // pred_check
      _
    $region10: #{tpu_custom_call.1} parent=5 // pred_check_branch
      %116 = sbr.rel (%p113) target = $region12
    $region11: #{tpu_custom_call.1} parent=5 // pred_region
      %s117 = ssub.s32 %s9, 1
      // Predicated region
      $region13: #{tpu_custom_call.1} parent=11 // pred_check
        %p118 = pneg %p56
      $region14: #{tpu_custom_call.1} parent=11 // pred_check_branch
        %120 = sbr.rel (%p118) target = $region16
      $region15: #{tpu_custom_call.1} parent=11 // pred_region
        _
      $region16: #{tpu_custom_call.1} parent=11 // pred_fallthru
        _
      // Predicated region
      $region17: #{tpu_custom_call.1} parent=11 // pred_check
        %p121 = pneg %p77
      $region18: #{tpu_custom_call.1} parent=11 // pred_check_branch
        %123 = sbr.rel (%p121) target = $region20
      $region19: #{tpu_custom_call.1} parent=11 // pred_region
        _
      $region20: #{tpu_custom_call.1} parent=11 // pred_fallthru
        _
    $region12: #{tpu_custom_call.1} parent=5 // pred_fallthru
      _
    %p124 = scmp.lt.s32.totalorder %s9, 2
    // Predicated region
    $region21: #{tpu_custom_call.1} parent=5 // pred_check
      %p125 = pneg %p124
    $region22: #{tpu_custom_call.1} parent=5 // pred_check_branch
      %127 = sbr.rel (%p125) target = $region24
    $region23: #{tpu_custom_call.1} parent=5 // pred_region
      // Predicated region
      $region25: #{tpu_custom_call.1} parent=23 // pred_check
        %p128 = pneg %p29
      $region26: #{tpu_custom_call.1} parent=23 // pred_check_branch
        %130 = sbr.rel (%p128) target = $region28
      $region27: #{tpu_custom_call.1} parent=23 // pred_region
        %s131 = smul.u32 32, %s9
        %p132 = scmp.lt.s32.totalorder %s131, 63
        %s133 = scalar_select %p132, %s131, 63
        %s134 = smul.addr %s133, 8
        %s135 = scalar_lea.vmem %s0, %s134
        %s136 = smul.u32 32, %s9
      $region28: #{tpu_custom_call.1} parent=23 // pred_fallthru
        _
    $region24: #{tpu_custom_call.1} parent=5 // pred_fallthru
      _
    %p137 = scmp.le.s32.totalorder 1, %s9
    %p138 = scmp.lt.s32.totalorder %s9, 3
    %p139 = pnand %p137, %p138
    %p140 = pneg %p139
    // Predicated region
    $region29: #{tpu_custom_call.1} parent=5 // pred_check
      _
    $region30: #{tpu_custom_call.1} parent=5 // pred_check_branch
      %142 = sbr.rel (%p139) target = $region32
    $region31: #{tpu_custom_call.1} parent=5 // pred_region
      %s143 = ssub.s32 %s9, 1
      %s144 = smul.u32 32, %s14
      %p145 = scmp.lt.s32.totalorder %s144, 63
      %s146 = scalar_select %p145, %s144, 63
      %s147 = smul.addr %s146, 8
      %s148 = scalar_lea.vmem %s0, %s147
      %p149 = pneg %p35
      %p150 = pneg %p32
      %p151 = pneg %p56
      %p152 = pneg %p53
      %p153 = pneg %p77
      %p154 = pneg %p74
      %p155 = pneg %p103
      %p156 = pneg %p100
      %s157 = smul.u32 32, %s14
      %p158 = scmp.lt.s32.totalorder %s157, 63
      %s159 = scalar_select %p158, %s157, 63
      %s160 = smul.addr %s159, 8
      %s161 = scalar_lea.vmem %s3, %s160
      %s162 = smul.u32 32, %s14
      %p163 = scmp.lt.s32.totalorder %s162, 63
      %s164 = scalar_select %p163, %s162, 63
      %s165 = smul.addr %s164, 8
      %s166 = scalar_lea.vmem %s0, %s165
      %s167 = smul.u32 32, %s14
      %s168 = smul.u32 32, %s14
      %p169 = scmp.lt.s32.totalorder %s168, 63
      %s170 = scalar_select %p169, %s168, 63
      %s171 = smul.addr %s170, 8
      %s172 = scalar_lea.vmem %s3, %s171
      %s173 = smul.u32 32, %s14
      %v174 = vld [vmem:[%s166] sm:$0xff]
      %v175 = vld [vmem:[%s166 + $0x8] sm:$0xff]
      %v176 = vld [vmem:[%s166 + $0x10] sm:$0xff]
      %v177 = vld [vmem:[%s166 + $0x18] sm:$0xff]
      %v178 = vld [vmem:[%s166 + $0x20] sm:$0xff]
      %v179 = vld [vmem:[%s166 + $0x28] sm:$0xff]
      %v180 = vld [vmem:[%s166 + $0x30] sm:$0xff]
      %v181 = vld [vmem:[%s166 + $0x38] sm:$0xff]
      %v182 = vld [vmem:[%s166 + $0x40] sm:$0xff]
      %v183 = vld [vmem:[%s166 + $0x48] sm:$0xff]
      %v184 = vld [vmem:[%s166 + $0x50] sm:$0xff]
      %v185 = vld [vmem:[%s166 + $0x58] sm:$0xff]
      %v186 = vld [vmem:[%s166 + $0x60] sm:$0xff]
      %v187 = vld [vmem:[%s166 + $0x68] sm:$0xff]
      %v188 = vld [vmem:[%s166 + $0x70] sm:$0xff]
      %v189 = vld [vmem:[%s166 + $0x78] sm:$0xff]
      %v190 = vld [vmem:[%s166 + $0x80] sm:$0xff]
      %v191 = vld [vmem:[%s166 + $0x88] sm:$0xff]
      %v192 = vld [vmem:[%s166 + $0x90] sm:$0xff]
      %v193 = vld [vmem:[%s166 + $0x98] sm:$0xff]
      %v194 = vld [vmem:[%s166 + $0xa0] sm:$0xff]
      %v195 = vld [vmem:[%s166 + $0xa8] sm:$0xff]
      %v196 = vld [vmem:[%s166 + $0xb0] sm:$0xff]
      %v197 = vld [vmem:[%s166 + $0xb8] sm:$0xff]
      %v198 = vld [vmem:[%s166 + $0xc0] sm:$0xff]
      %v199 = vld [vmem:[%s166 + $0xc8] sm:$0xff]
      %v200 = vld [vmem:[%s166 + $0xd0] sm:$0xff]
      %v201 = vld [vmem:[%s166 + $0xd8] sm:$0xff]
      %v202 = vld [vmem:[%s166 + $0xe0] sm:$0xff]
      %v203 = vld [vmem:[%s166 + $0xe8] sm:$0xff]
      %v204 = vld [vmem:[%s166 + $0xf0] sm:$0xff]
      %v205 = vld [vmem:[%s166 + $0xf8] sm:$0xff]
      %v206 = vld [vmem:[%s1] sm:$0xff]
      %v207 = vld [vmem:[%s1 + $0x8] sm:$0xff]
      %v208 = vld [vmem:[%s1 + $0x10] sm:$0xff]
      %v209 = vld [vmem:[%s1 + $0x18] sm:$0xff]
      %v210 = vld [vmem:[%s2] sm:$0x1]
      %v212 = vlaneseq
      %v213 = vshrl.u32 %v212, 7
      %v214 = vsub.s32 0, %v213
      %v215 = vrot.slane %v210, %v214
      %vm217 = vcmask 261120
      %v219 = vsel %vm217, %v174, 0
      %v222 = vsel %vm217, %v175, 0
      %v225 = vsel %vm217, %v176, 0
      %v228 = vsel %vm217, %v177, 0
      %v231 = vsel %vm217, %v178, 0
      %v234 = vsel %vm217, %v179, 0
      %v237 = vsel %vm217, %v180, 0
      %v240 = vsel %vm217, %v181, 0
      %v243 = vsel %vm217, %v182, 0
      %v246 = vsel %vm217, %v183, 0
      %v249 = vsel %vm217, %v184, 0
      %v252 = vsel %vm217, %v185, 0
      %v255 = vsel %vm217, %v186, 0
      %v258 = vsel %vm217, %v187, 0
      %v261 = vsel %vm217, %v188, 0
      %v264 = vsel %vm217, %v189, 0
      %v267 = vsel %vm217, %v190, 0
      %v270 = vsel %vm217, %v191, 0
      %v273 = vsel %vm217, %v192, 0
      %v276 = vsel %vm217, %v193, 0
      %v279 = vsel %vm217, %v194, 0
      %v282 = vsel %vm217, %v195, 0
      %v285 = vsel %vm217, %v196, 0
      %v288 = vsel %vm217, %v197, 0
      %v291 = vsel %vm217, %v198, 0
      %v294 = vsel %vm217, %v199, 0
      %v297 = vsel %vm217, %v200, 0
      %v300 = vsel %vm217, %v201, 0
      %v303 = vsel %vm217, %v202, 0
      %v306 = vsel %vm217, %v203, 0
      %v309 = vsel %vm217, %v204, 0
      %v312 = vsel %vm217, %v205, 0
      %314 = vmatprep.subr.mxu0 0.0
      %315 = vmatpush1.msra.mxu0 %v206
      %316 = vmatprep.subr.mxu0 0.0
      %317 = vmatpush1.msra.mxu0 %v207
      %318 = vmatprep.subr.mxu0 0.0
      %319 = vmatpush1.msra.mxu0 %v208
      %320 = vmatprep.subr.mxu0 0.0
      %321 = vmatpush1.msra.mxu0 %v209
      %322 = vmatprep.subr.mxu0 0.0
      %323 = vmatpush1.msra.mxu0 0.0
      %324 = vmatprep.subr.mxu0 0.0
      %325 = vmatpush1.msra.mxu0 0.0
      %326 = vmatprep.subr.mxu0 0.0
      %327 = vmatpush1.msra.mxu0 0.0
      %328 = vmatprep.subr.mxu0 0.0
      %329 = vmatpush1.msra.mxu0 0.0
      %330 = vmatprep.subr.mxu0 0.0
      %331 = vmatpush1.msra.mxu0 0.0
      %332 = vmatprep.subr.mxu0 0.0
      %333 = vmatpush1.msra.mxu0 0.0
      %334 = vmatprep.subr.mxu0 0.0
      %335 = vmatpush1.msra.mxu0 0.0
      %336 = vmatprep.subr.mxu0 0.0
      %337 = vmatpush1.msra.mxu0 0.0
      %338 = vmatprep.subr.mxu0 0.0
      %339 = vmatpush1.msra.mxu0 0.0
      %340 = vmatprep.subr.mxu0 0.0
      %341 = vmatpush1.msra.mxu0 0.0
      %342 = vmatprep.subr.mxu0 0.0
      %343 = vmatpush1.msra.mxu0 0.0
      %344 = vmatprep.subr.mxu0 0.0
      %345 = vmatpush1.msra.mxu0 0.0
      %346 = vmatprep.subr.mxu0 0.0
      %347 = vmatpush1.msra.mxu0 0.0
      %348 = vmatprep.subr.mxu0 0.0
      %349 = vmatpush1.msra.mxu0 0.0
      %350 = vmatprep.subr.mxu0 0.0
      %351 = vmatpush1.msra.mxu0 0.0
      %352 = vmatprep.subr.mxu0 0.0
      %353 = vmatpush1.msra.mxu0 0.0
      %354 = vmatprep.subr.mxu0 0.0
      %355 = vmatpush1.msra.mxu0 0.0
      %356 = vmatprep.subr.mxu0 0.0
      %357 = vmatpush1.msra.mxu0 0.0
      %358 = vmatprep.subr.mxu0 0.0
      %359 = vmatpush1.msra.mxu0 0.0
      %360 = vmatprep.subr.mxu0 0.0
      %361 = vmatpush1.msra.mxu0 0.0
      %362 = vmatprep.subr.mxu0 0.0
      %363 = vmatpush1.msra.mxu0 0.0
      %364 = vmatprep.subr.mxu0 0.0
      %365 = vmatpush1.msra.mxu0 0.0
      %366 = vmatprep.subr.mxu0 0.0
      %367 = vmatpush1.msra.mxu0 0.0
      %368 = vmatprep.subr.mxu0 0.0
      %369 = vmatpush1.msra.mxu0 0.0
      %370 = vmatprep.subr.mxu0 0.0
      %371 = vmatpush1.msra.mxu0 0.0
      %372 = vmatprep.subr.mxu0 0.0
      %373 = vmatpush1.msra.mxu0 0.0
      %374 = vmatprep.subr.mxu0 0.0
      %375 = vmatpush1.msra.mxu0 0.0
      %376 = vmatprep.subr.mxu0 0.0
      %377 = vmatpush1.msra.mxu0 0.0
      %378 = vmatprep.mubr.f32.mxu0 0.0
      %379 = vmatmul.mubr.f32.gmra.mrb[0].mxu0 %v219
      %v380 = vpop.f32.mrb[0].mxu0
      %v381 = vadd.f32 %v215, %v380
      %v382 = vpop.f32.mrb[0].mxu0
      %383 = vmatprep.mubr.f32.mxu0 0.0
      %384 = vmatmul.mubr.f32.gmra.mrb[0].mxu0 %v222
      %v385 = vpop.f32.mrb[0].mxu0
      %v386 = vadd.f32 %v215, %v385
      %v387 = vpop.f32.mrb[0].mxu0
      %388 = vmatprep.mubr.f32.mxu0 0.0
      %389 = vmatmul.mubr.f32.gmra.mrb[0].mxu0 %v225
      %v390 = vpop.f32.mrb[0].mxu0
      %v391 = vadd.f32 %v215, %v390
      %v392 = vpop.f32.mrb[0].mxu0
      %393 = vmatprep.mubr.f32.mxu0 0.0
      %394 = vmatmul.mubr.f32.gmra.mrb[0].mxu0 %v228
      %v395 = vpop.f32.mrb[0].mxu0
      %v396 = vadd.f32 %v215, %v395
      %v397 = vpop.f32.mrb[0].mxu0
      %398 = vmatprep.mubr.f32.mxu0 0.0
      %399 = vmatmul.mubr.f32.gmra.mrb[0].mxu0 %v231
      %v400 = vpop.f32.mrb[0].mxu0
      %v401 = vadd.f32 %v215, %v400
      %v402 = vpop.f32.mrb[0].mxu0
      %403 = vmatprep.mubr.f32.mxu0 0.0
      %404 = vmatmul.mubr.f32.gmra.mrb[0].mxu0 %v234
      %v405 = vpop.f32.mrb[0].mxu0
      %v406 = vadd.f32 %v215, %v405
      %v407 = vpop.f32.mrb[0].mxu0
      %408 = vmatprep.mubr.f32.mxu0 0.0
      %409 = vmatmul.mubr.f32.gmra.mrb[0].mxu0 %v237
      %v410 = vpop.f32.mrb[0].mxu0
      %v411 = vadd.f32 %v215, %v410
      %v412 = vpop.f32.mrb[0].mxu0
      %413 = vmatprep.mubr.f32.mxu0 0.0
      %414 = vmatmul.mubr.f32.gmra.mrb[0].mxu0 %v240
      %v415 = vpop.f32.mrb[0].mxu0
      %v416 = vadd.f32 %v215, %v415
      %v417 = vpop.f32.mrb[0].mxu0
      %418 = vmatprep.mubr.f32.mxu0 0.0
      %419 = vmatmul.mubr.f32.gmra.mrb[0].mxu0 %v243
      %v420 = vpop.f32.mrb[0].mxu0
      %v421 = vadd.f32 %v215, %v420
      %v422 = vpop.f32.mrb[0].mxu0
      %423 = vmatprep.mubr.f32.mxu0 0.0
      %424 = vmatmul.mubr.f32.gmra.mrb[0].mxu0 %v246
      %v425 = vpop.f32.mrb[0].mxu0
      %v426 = vadd.f32 %v215, %v425
      %v427 = vpop.f32.mrb[0].mxu0
      %428 = vmatprep.mubr.f32.mxu0 0.0
      %429 = vmatmul.mubr.f32.gmra.mrb[0].mxu0 %v249
      %v430 = vpop.f32.mrb[0].mxu0
      %v431 = vadd.f32 %v215, %v430
      %v432 = vpop.f32.mrb[0].mxu0
      %433 = vmatprep.mubr.f32.mxu0 0.0
      %434 = vmatmul.mubr.f32.gmra.mrb[0].mxu0 %v252
      %v435 = vpop.f32.mrb[0].mxu0
      %v436 = vadd.f32 %v215, %v435
      %v437 = vpop.f32.mrb[0].mxu0
      %438 = vmatprep.mubr.f32.mxu0 0.0
      %439 = vmatmul.mubr.f32.gmra.mrb[0].mxu0 %v255
      %v440 = vpop.f32.mrb[0].mxu0
      %v441 = vadd.f32 %v215, %v440
      %v442 = vpop.f32.mrb[0].mxu0
      %443 = vmatprep.mubr.f32.mxu0 0.0
      %444 = vmatmul.mubr.f32.gmra.mrb[0].mxu0 %v258
      %v445 = vpop.f32.mrb[0].mxu0
      %v446 = vadd.f32 %v215, %v445
      %v447 = vpop.f32.mrb[0].mxu0
      %448 = vmatprep.mubr.f32.mxu0 0.0
      %449 = vmatmul.mubr.f32.gmra.mrb[0].mxu0 %v261
      %v450 = vpop.f32.mrb[0].mxu0
      %v451 = vadd.f32 %v215, %v450
      %v452 = vpop.f32.mrb[0].mxu0
      %453 = vmatprep.mubr.f32.mxu0 0.0
      %454 = vmatmul.mubr.f32.gmra.mrb[0].mxu0 %v264
      %v455 = vpop.f32.mrb[0].mxu0
      %v456 = vadd.f32 %v215, %v455
      %v457 = vpop.f32.mrb[0].mxu0
      %458 = vmatprep.mubr.f32.mxu0 0.0
      %459 = vmatmul.mubr.f32.gmra.mrb[0].mxu0 %v267
      %v460 = vpop.f32.mrb[0].mxu0
      %v461 = vadd.f32 %v215, %v460
      %v462 = vpop.f32.mrb[0].mxu0
      %463 = vmatprep.mubr.f32.mxu0 0.0
      %464 = vmatmul.mubr.f32.gmra.mrb[0].mxu0 %v270
      %v465 = vpop.f32.mrb[0].mxu0
      %v466 = vadd.f32 %v215, %v465
      %v467 = vpop.f32.mrb[0].mxu0
      %468 = vmatprep.mubr.f32.mxu0 0.0
      %469 = vmatmul.mubr.f32.gmra.mrb[0].mxu0 %v273
      %v470 = vpop.f32.mrb[0].mxu0
      %v471 = vadd.f32 %v215, %v470
      %v472 = vpop.f32.mrb[0].mxu0
      %473 = vmatprep.mubr.f32.mxu0 0.0
      %474 = vmatmul.mubr.f32.gmra.mrb[0].mxu0 %v276
      %v475 = vpop.f32.mrb[0].mxu0
      %v476 = vadd.f32 %v215, %v475
      %v477 = vpop.f32.mrb[0].mxu0
      %478 = vmatprep.mubr.f32.mxu0 0.0
      %479 = vmatmul.mubr.f32.gmra.mrb[0].mxu0 %v279
      %v480 = vpop.f32.mrb[0].mxu0
      %v481 = vadd.f32 %v215, %v480
      %v482 = vpop.f32.mrb[0].mxu0
      %483 = vmatprep.mubr.f32.mxu0 0.0
      %484 = vmatmul.mubr.f32.gmra.mrb[0].mxu0 %v282
      %v485 = vpop.f32.mrb[0].mxu0
      %v486 = vadd.f32 %v215, %v485
      %v487 = vpop.f32.mrb[0].mxu0
      %488 = vmatprep.mubr.f32.mxu0 0.0
      %489 = vmatmul.mubr.f32.gmra.mrb[0].mxu0 %v285
      %v490 = vpop.f32.mrb[0].mxu0
      %v491 = vadd.f32 %v215, %v490
      %v492 = vpop.f32.mrb[0].mxu0
      %493 = vmatprep.mubr.f32.mxu0 0.0
      %494 = vmatmul.mubr.f32.gmra.mrb[0].mxu0 %v288
      %v495 = vpop.f32.mrb[0].mxu0
      %v496 = vadd.f32 %v215, %v495
      %v497 = vpop.f32.mrb[0].mxu0
      %498 = vmatprep.mubr.f32.mxu0 0.0
      %499 = vmatmul.mubr.f32.gmra.mrb[0].mxu0 %v291
      %v500 = vpop.f32.mrb[0].mxu0
      %v501 = vadd.f32 %v215, %v500
      %v502 = vpop.f32.mrb[0].mxu0
      %503 = vmatprep.mubr.f32.mxu0 0.0
      %504 = vmatmul.mubr.f32.gmra.mrb[0].mxu0 %v294
      %v505 = vpop.f32.mrb[0].mxu0
      %v506 = vadd.f32 %v215, %v505
      %v507 = vpop.f32.mrb[0].mxu0
      %508 = vmatprep.mubr.f32.mxu0 0.0
      %509 = vmatmul.mubr.f32.gmra.mrb[0].mxu0 %v297
      %v510 = vpop.f32.mrb[0].mxu0
      %v511 = vadd.f32 %v215, %v510
      %v512 = vpop.f32.mrb[0].mxu0
      %513 = vmatprep.mubr.f32.mxu0 0.0
      %514 = vmatmul.mubr.f32.gmra.mrb[0].mxu0 %v300
      %v515 = vpop.f32.mrb[0].mxu0
      %v516 = vadd.f32 %v215, %v515
      %v517 = vpop.f32.mrb[0].mxu0
      %518 = vmatprep.mubr.f32.mxu0 0.0
      %519 = vmatmul.mubr.f32.gmra.mrb[0].mxu0 %v303
      %v520 = vpop.f32.mrb[0].mxu0
      %v521 = vadd.f32 %v215, %v520
      %v522 = vpop.f32.mrb[0].mxu0
      %523 = vmatprep.mubr.f32.mxu0 0.0
      %524 = vmatmul.mubr.f32.gmra.mrb[0].mxu0 %v306
      %v525 = vpop.f32.mrb[0].mxu0
      %v526 = vadd.f32 %v215, %v525
      %v527 = vpop.f32.mrb[0].mxu0
      %528 = vmatprep.mubr.f32.mxu0 0.0
      %529 = vmatmul.mubr.f32.gmra.mrb[0].mxu0 %v309
      %v530 = vpop.f32.mrb[0].mxu0
      %v531 = vadd.f32 %v215, %v530
      %v532 = vpop.f32.mrb[0].mxu0
      %533 = vmatprep.mubr.f32.mxu0 0.0
      %534 = vmatmul.mubr.f32.gmra.mrb[0].mxu0 %v312
      %v535 = vpop.f32.mrb[0].mxu0
      %v536 = vadd.f32 %v215, %v535
      %v537 = vpop.f32.mrb[0].mxu0
      %538 = vdwg.mxu0
      %vm539 = vcmask 130048
      %540 = vst.msk [vmem:[%s172] sm:$0xff] %vm539, %v381
      %541 = vst.msk [vmem:[%s172 + $0x8] sm:$0xff] %vm539, %v386
      %542 = vst.msk [vmem:[%s172 + $0x10] sm:$0xff] %vm539, %v391
      %543 = vst.msk [vmem:[%s172 + $0x18] sm:$0xff] %vm539, %v396
      %544 = vst.msk [vmem:[%s172 + $0x20] sm:$0xff] %vm539, %v401
      %545 = vst.msk [vmem:[%s172 + $0x28] sm:$0xff] %vm539, %v406
      %546 = vst.msk [vmem:[%s172 + $0x30] sm:$0xff] %vm539, %v411
      %547 = vst.msk [vmem:[%s172 + $0x38] sm:$0xff] %vm539, %v416
      %548 = vst.msk [vmem:[%s172 + $0x40] sm:$0xff] %vm539, %v421
      %549 = vst.msk [vmem:[%s172 + $0x48] sm:$0xff] %vm539, %v426
      %550 = vst.msk [vmem:[%s172 + $0x50] sm:$0xff] %vm539, %v431
      %551 = vst.msk [vmem:[%s172 + $0x58] sm:$0xff] %vm539, %v436
      %552 = vst.msk [vmem:[%s172 + $0x60] sm:$0xff] %vm539, %v441
      %553 = vst.msk [vmem:[%s172 + $0x68] sm:$0xff] %vm539, %v446
      %554 = vst.msk [vmem:[%s172 + $0x70] sm:$0xff] %vm539, %v451
      %555 = vst.msk [vmem:[%s172 + $0x78] sm:$0xff] %vm539, %v456
      %556 = vst.msk [vmem:[%s172 + $0x80] sm:$0xff] %vm539, %v461
      %557 = vst.msk [vmem:[%s172 + $0x88] sm:$0xff] %vm539, %v466
      %558 = vst.msk [vmem:[%s172 + $0x90] sm:$0xff] %vm539, %v471
      %559 = vst.msk [vmem:[%s172 + $0x98] sm:$0xff] %vm539, %v476
      %560 = vst.msk [vmem:[%s172 + $0xa0] sm:$0xff] %vm539, %v481
      %561 = vst.msk [vmem:[%s172 + $0xa8] sm:$0xff] %vm539, %v486
      %562 = vst.msk [vmem:[%s172 + $0xb0] sm:$0xff] %vm539, %v491
      %563 = vst.msk [vmem:[%s172 + $0xb8] sm:$0xff] %vm539, %v496
      %564 = vst.msk [vmem:[%s172 + $0xc0] sm:$0xff] %vm539, %v501
      %565 = vst.msk [vmem:[%s172 + $0xc8] sm:$0xff] %vm539, %v506
      %566 = vst.msk [vmem:[%s172 + $0xd0] sm:$0xff] %vm539, %v511
      %567 = vst.msk [vmem:[%s172 + $0xd8] sm:$0xff] %vm539, %v516
      %568 = vst.msk [vmem:[%s172 + $0xe0] sm:$0xff] %vm539, %v521
      %569 = vst.msk [vmem:[%s172 + $0xe8] sm:$0xff] %vm539, %v526
      %570 = vst.msk [vmem:[%s172 + $0xf0] sm:$0xff] %vm539, %v531
      %571 = vst.msk [vmem:[%s172 + $0xf8] sm:$0xff] %vm539, %v536
      %s572 = smul.u32 32, %s14
      %p573 = scmp.lt.s32.totalorder %s572, 63
      %s574 = scalar_select %p573, %s572, 63
      %s575 = smul.addr %s574, 8
      %s576 = scalar_lea.vmem %s3, %s575
      // Predicated region
      $region33: #{tpu_custom_call.1} parent=31 // pred_check
        %p577 = pneg %p100
      $region34: #{tpu_custom_call.1} parent=31 // pred_check_branch
        %579 = sbr.rel (%p577) target = $region36
      $region35: #{tpu_custom_call.1} parent=31 // pred_region
        %s580 = smul.u32 32, %s14
      $region36: #{tpu_custom_call.1} parent=31 // pred_fallthru
        _
    $region32: #{tpu_custom_call.1} parent=5 // pred_fallthru
      _
    %p581 = scmp.le.s32.totalorder 2, %s9
    // Predicated region
    $region37: #{tpu_custom_call.1} parent=5 // pred_check
      %p582 = pneg %p581
    $region38: #{tpu_custom_call.1} parent=5 // pred_check_branch
      %584 = sbr.rel (%p582) target = $region40
    $region39: #{tpu_custom_call.1} parent=5 // pred_region
      %s585 = ssub.s32 %s9, 2
      // Predicated region
      $region41: #{tpu_custom_call.1} parent=39 // pred_check
        %p586 = pneg %p106
      $region42: #{tpu_custom_call.1} parent=39 // pred_check_branch
        %588 = sbr.rel (%p586) target = $region44
      $region43: #{tpu_custom_call.1} parent=39 // pred_region
        %s589 = smul.u32 32, %s15
        %p590 = scmp.lt.s32.totalorder %s589, 63
        %s591 = scalar_select %p590, %s589, 63
        %s592 = smul.addr %s591, 8
        %s593 = scalar_lea.vmem %s3, %s592
      $region44: #{tpu_custom_call.1} parent=39 // pred_fallthru
        _
    $region40: #{tpu_custom_call.1} parent=5 // pred_fallthru
      _
  $region6: #{tpu_custom_call.1} parent=0 // loop_footer
    %s13 = sadd.s32 1, %s9
  $region7: #{tpu_custom_call.1} parent=0 // loop_footer_branch
    %8 = sbr.rel target = $region3
  $region8: #{tpu_custom_call.1} parent=0 // loop_exit
    _

</llo_original>
